<compile_context>
chip_gen: v7x
topology: tpu7x:2x2x1
jax: 0.10.0
libtpu: 0.0.40
codegen_flags: <defaults>
</compile_context>

<pallas_src>
import jax
import jax.numpy as jnp
from jax.experimental import pallas as pl
from jax.experimental.pallas import tpu as pltpu


def m_forward_kernel(x_ref, w1_ref, b1_ref, w2_ref, b2_ref, o_ref):
    # All refs are flat f32[1] in SMEM -> pure scalar-unit math.
    x = x_ref[0]
    w1 = w1_ref[0]
    b1 = b1_ref[0]
    w2 = w2_ref[0]
    b2 = b2_ref[0]

    # layers/1/linear: y = x @ w1.T + b1   (1x1 Linear -> scalar FMA)
    y = x * w1 + b1
    # layers/1/matmul: z = y @ y.clone().T (1x1 operand -> scalar square)
    z = y * y
    # unsqueeze(0) is pure reshape glue (applied in the jitted wrapper).
    # layers/2/linear: out = z @ w2.T + b2 -> scalar FMA
    o_ref[0] = z * w2 + b2


@jax.jit
def m_forward(x, w1, b1, w2, b2):
    # The module's own Linear(1,1)-after-matmul constraint forces a (1,1) input.
    assert x.shape == (1, 1), "Linear(1,1) after the matmul forces a (1, 1) input"
    dtype = jnp.float32
    smem = pl.BlockSpec(memory_space=pltpu.MemorySpace.SMEM)

    out = pl.pallas_call(
        m_forward_kernel,
        out_shape=jax.ShapeDtypeStruct((1,), dtype),
        in_specs=[smem, smem, smem, smem, smem],
        out_specs=smem,
        cost_estimate=pl.CostEstimate(flops=3, transcendentals=0, bytes_accessed=24),
    )(
        x.reshape(-1).astype(dtype),
        w1.reshape(-1).astype(dtype),
        b1.reshape(-1).astype(dtype),
        w2.reshape(-1).astype(dtype),
        b2.reshape(-1).astype(dtype),
    )

    # torch: x.unsqueeze(0) before the second Linear; Linear acts on the last
    # axis, so the leading-dim insertion commutes -> reshape after the kernel.
    # Inside jit this is a free metadata op.
    return out.reshape(1, 1, 1)


def m_forward_ref(x, w1, b1, w2, b2):
    # Pure-JAX reference reproducing the torch forward exactly.
    y = x @ w1.T + b1
    z = y @ y.T
    z = z[None]
    return z @ w2.T + b2


if __name__ == "__main__":
    key = jax.random.PRNGKey(0)
    kx, kw1, kb1, kw2, kb2 = jax.random.split(key, 5)

    # torch.nn.Linear(1, 1) default init: U(-1/sqrt(1), 1/sqrt(1)) = U(-1, 1).
    w1 = jax.random.uniform(kw1, (1, 1), jnp.float32, -1.0, 1.0)
    b1 = jax.random.uniform(kb1, (1,), jnp.float32, -1.0, 1.0)
    w2 = jax.random.uniform(kw2, (1, 1), jnp.float32, -1.0, 1.0)
    b2 = jax.random.uniform(kb2, (1,), jnp.float32, -1.0, 1.0)

    x = jax.random.normal(kx, (1, 1), jnp.float32)

    out = m_forward(x, w1, b1, w2, b2)
    out = jax.block_until_ready(out)

    ref = m_forward_ref(x, w1, b1, w2, b2)
    assert out.shape == (1, 1, 1), out.shape
    assert jnp.allclose(out, ref, atol=1e-6, rtol=1e-6), (out, ref)
    print("KERNEL_OK")
</pallas_src>

<mosaic_0001>
module attributes {stable_mosaic.version = 11 : i64} {
  func.func @m_forward_kernel(%arg0: memref<1xf32, #tpu.memory_space<smem>>, %arg1: memref<1xf32, #tpu.memory_space<smem>>, %arg2: memref<1xf32, #tpu.memory_space<smem>>, %arg3: memref<1xf32, #tpu.memory_space<smem>>, %arg4: memref<1xf32, #tpu.memory_space<smem>>, %arg5: memref<1xf32, #tpu.memory_space<smem>>) attributes {dimension_semantics = [], scalar_prefetch = 0 : i64, scratch_operands = 0 : i64, tpu.core_type = #tpu.core_type<tc>} {
    %c0 = arith.constant 0 : index
    %0 = memref.load %arg0[%c0] : memref<1xf32, #tpu.memory_space<smem>>
    %c0_0 = arith.constant 0 : index
    %1 = memref.load %arg1[%c0_0] : memref<1xf32, #tpu.memory_space<smem>>
    %c0_1 = arith.constant 0 : index
    %2 = memref.load %arg2[%c0_1] : memref<1xf32, #tpu.memory_space<smem>>
    %c0_2 = arith.constant 0 : index
    %3 = memref.load %arg3[%c0_2] : memref<1xf32, #tpu.memory_space<smem>>
    %c0_3 = arith.constant 0 : index
    %4 = memref.load %arg4[%c0_3] : memref<1xf32, #tpu.memory_space<smem>>
    %5 = arith.mulf %0, %1 : f32
    %6 = arith.addf %5, %2 : f32
    %7 = arith.mulf %6, %6 : f32
    %8 = arith.mulf %7, %3 : f32
    %9 = arith.addf %8, %4 : f32
    %c0_4 = arith.constant 0 : index
    %10 = memref.load %arg5[%c0_4] : memref<1xf32, #tpu.memory_space<smem>>
    memref.store %9, %arg5[%c0_4] : memref<1xf32, #tpu.memory_space<smem>>
    return
  }
}

</mosaic_0001>

<llo_original>
// kernel: m_forward.1
$region0: #{m_forward.1}
  #allocation0 [shape = 'u32[]', space=smem, size = 0x4, offset = 0x4, fixed_abs, tag = 'smem constant byte address 0x4 - core index']
  #allocation1 [shape = 'u32[144,128]{1,0:T(1,128)}', space=vmem, size = 0x12000, scoped, tag = 'internal scratch']
  #allocation2 [shape = 'f32[1]{0:T(128)S(6)}', space=smem, size = 0x200, scoped, tag = 'scoped memory for m_forward.1']
  #allocation3 [shape = 'f32[1]{0:T(128)S(6)}', space=smem, size = 0x200, scoped, tag = 'scoped memory for m_forward.1']
  #allocation4 [shape = 'f32[1]{0:T(128)S(6)}', space=smem, size = 0x200, scoped, tag = 'scoped memory for m_forward.1']
  #allocation5 [shape = 'f32[1]{0:T(128)S(6)}', space=smem, size = 0x200, scoped, tag = 'scoped memory for m_forward.1']
  #allocation6 [shape = 'f32[1]{0:T(128)S(6)}', space=smem, size = 0x200, scoped, tag = 'scoped memory for m_forward.1']
  %s0 = inlined_call_operand.<no memory space> [shape: f32[1], index: 0, kind: input, shape index: {}]
  %s1 = inlined_call_operand.<no memory space> [shape: f32[1], index: 1, kind: input, shape index: {}]
  %s2 = inlined_call_operand.<no memory space> [shape: f32[1], index: 2, kind: input, shape index: {}]
  %s3 = inlined_call_operand.<no memory space> [shape: f32[1], index: 3, kind: input, shape index: {}]
  %s4 = inlined_call_operand.<no memory space> [shape: f32[1], index: 4, kind: input, shape index: {}]
  %s5 = inlined_call_operand.hbm [shape: f32[1], index: 5, kind: output, shape index: {}]
  %s6 = sld [smem:[#allocation0]]
  $region30: #{m_forward.1} parent=0
    _
  %s8 = ssub.s32 1, %s6
  %s9 = scalar_select 0, %s8, %s6
  %10 = sst [smem:[#allocation2]] %s0
  %11 = sst [smem:[#allocation3]] %s1
  %12 = sst [smem:[#allocation4]] %s2
  %13 = sst [smem:[#allocation5]] %s3
  %14 = sst [smem:[#allocation6]] %s4
  $region1: #{m_forward.1} parent=0
    #allocation7 [shape = 'u8[512]{0}', space=smem, size = 0x200, scoped, tag = 'output window, operand 0, single buffered']
    #allocation8 [shape = 's32[1]{0}', space=sflag, size = 0x4, scoped, tag = 'scoped memory for m_forward.1']
    %15 = vsyncpa [#allocation8], 0
    // Predicated region
    $region2: #{m_forward.1} parent=1 // pred_check
      _
    $region3: #{m_forward.1} parent=1 // pred_check_branch
      %17 = sbr.rel (0) target = $region5
    $region4: #{m_forward.1} parent=1 // pred_region
      _
    $region5: #{m_forward.1} parent=1 // pred_fallthru
      _
    // Predicated region
    $region6: #{m_forward.1} parent=1 // pred_check
      _
    $region7: #{m_forward.1} parent=1 // pred_check_branch
      %19 = sbr.rel (0) target = $region9
    $region8: #{m_forward.1} parent=1 // pred_region
      _
    $region9: #{m_forward.1} parent=1 // pred_fallthru
      _
    // Predicated region
    $region10: #{m_forward.1} parent=1 // pred_check
      _
    $region11: #{m_forward.1} parent=1 // pred_check_branch
      %21 = sbr.rel (0) target = $region13
    $region12: #{m_forward.1} parent=1 // pred_region
      _
    $region13: #{m_forward.1} parent=1 // pred_fallthru
      _
    // Predicated region
    $region14: #{m_forward.1} parent=1 // pred_check
      _
    $region15: #{m_forward.1} parent=1 // pred_check_branch
      %23 = sbr.rel (0) target = $region17
    $region16: #{m_forward.1} parent=1 // pred_region
      _
    $region17: #{m_forward.1} parent=1 // pred_fallthru
      _
    // Predicated region
    $region18: #{m_forward.1} parent=1 // pred_check
      _
    $region19: #{m_forward.1} parent=1 // pred_check_branch
      %25 = sbr.rel (0) target = $region21
    $region20: #{m_forward.1} parent=1 // pred_region
      _
    $region21: #{m_forward.1} parent=1 // pred_fallthru
      _
    %s26 = sld [smem:[#allocation2]]
    %s27 = sld [smem:[#allocation3]]
    %s28 = sld [smem:[#allocation4]]
    %s29 = sld [smem:[#allocation5]]
    %s30 = sld [smem:[#allocation6]]
    %s31 = smul.f32 %s26, %s27
    %s32 = sadd.f32 %s31, %s28
    %s33 = smul.f32 %s32, %s32
    %s34 = smul.f32 %s33, %s29
    %s35 = sadd.f32 %s34, %s30
    %s36 = scalar_lea.smem [#allocation7], 0
    %37 = sst [smem:[%s36]] %s35
    // Predicated region
    $region22: #{m_forward.1} parent=1 // pred_check
      _
    $region23: #{m_forward.1} parent=1 // pred_check_branch
      %39 = sbr.rel (0) target = $region25
    $region24: #{m_forward.1} parent=1 // pred_region
      %s41 = ssub.s32 16, 16
      %42 = vsyncadd [#allocation8], %s41
      %45 = dma.smem_to_hbm [#allocation7], 16, %s5, [#allocation8]
    $region25: #{m_forward.1} parent=1 // pred_fallthru
      _
    // Predicated region
    $region26: #{m_forward.1} parent=1 // pred_check
      _
    $region27: #{m_forward.1} parent=1 // pred_check_branch
      %47 = sbr.rel (0) target = $region29
    $region28: #{m_forward.1} parent=1 // pred_region
      %48 = dma.done [#allocation8], 16
    $region29: #{m_forward.1} parent=1 // pred_fallthru
      _
    %49 = sfence
    %50 = vsyncpa [#allocation8], 1

</llo_original>
